<compile_context>
chip_gen: v6e
topology: v6e:2x2x1
jax: 0.10.0
libtpu: 0.0.40
codegen_flags: <defaults>
</compile_context>

<pallas_src>
import functools

import jax
import jax.numpy as jnp
from jax.experimental import pallas as pl
from jax.experimental.pallas import tpu as pltpu

_LANE = 128
_SUBLANE = 8
_MAX_TILE_ROWS = 4096      # 2 MiB f32 block per input; amortizes per-step cost


def _cdiv(a, b):
    return -(-a // b)


def _round_up(a, b):
    return _cdiv(a, b) * b


def _num_tensorcores():
    """Best-effort TensorCore count of the attached chip (1 if unknown)."""
    try:
        info = pltpu.get_tpu_info()
    except Exception:
        return 1
    for name in ("num_cores", "core_count", "num_tensorcores",
                 "tensorcores_per_chip", "cores_per_chip"):
        v = getattr(info, name, None)
        if isinstance(v, int) and not isinstance(v, bool) and v >= 1:
            return v
    return 1


def _bce_terms(x, z):
    # numerically stable BCE-with-logits: max(x,0) - x*z + log1p(exp(-|x|))
    return jnp.maximum(x, 0.0) - x * z + jnp.log1p(jnp.exp(-jnp.abs(x)))


def _bce_sum_kernel(pred_ref, targ_ref, psum_ref, *, tile_r, steps, n_valid):
    """Accumulate the sum of stable BCE-with-logits terms into psum_ref (8,128)."""
    c = pl.program_id(0)          # chunk (core-parallel on multi-TC chips)
    j = pl.program_id(1)          # step within chunk (reduction / arbitrary)

    @pl.when(j == 0)
    def _():
        psum_ref[...] = jnp.zeros_like(psum_ref)

    x = pred_ref[...].astype(jnp.float32)   # logits
    z = targ_ref[...].astype(jnp.float32)   # targets in [0, 1]
    per = _bce_terms(x, z)

    tile = c * steps + j                     # global row-tile index
    elems_per_tile = tile_r * _LANE
    full_tiles = n_valid // elems_per_tile   # tiles with no overhanging rows

    def _accum(v):
        # (tile_r,128) -> (tile_r//8, 8, 128) is a pure sublane regroup (lane
        # dim untouched); sum(axis=0) is plain VPU vreg adds into the resident
        # (8,128) accumulator block.
        psum_ref[...] += v.reshape(tile_r // _SUBLANE, _SUBLANE, _LANE).sum(axis=0)

    @pl.when(tile < full_tiles)              # interior tiles: no mask needed
    def _():
        _accum(per)

    @pl.when(tile >= full_tiles)             # only tiles touching the ragged end
    def _():
        base = tile * elems_per_tile
        rid = jax.lax.broadcasted_iota(jnp.int32, (tile_r, _LANE), 0)
        cid = jax.lax.broadcasted_iota(jnp.int32, (tile_r, _LANE), 1)
        gidx = base + rid * _LANE + cid
        # select so garbage in over-hanging rows (or a clamped duplicate tile
        # on an odd tile count) cannot poison the sum.
        _accum(jnp.where(gidx < n_valid, per, 0.0))


def bce_loss_with_quant(qloss, target, prediction, split, codebook_weight=1.0):
    """Matches BCELossWithQuant.forward: returns (loss, log_dict)."""
    assert prediction.shape == target.shape
    n = int(prediction.size)
    assert n > 0

    def _flat(a):
        if a.dtype not in (jnp.float32, jnp.bfloat16):
            a = a.astype(jnp.float32)
        return a.reshape(-1)

    p_flat = _flat(prediction)
    t_flat = _flat(target)

    rows = n // _LANE
    n_aligned = rows * _LANE

    total = jnp.float32(0.0)

    if rows > 0:
        def _as_lanes(a):
            if n_aligned != n:
                a = a[:n_aligned]            # aligned prefix; tail handled in epilogue
            return a.reshape(rows, _LANE)

        p2 = _as_lanes(p_flat)
        t2 = _as_lanes(t_flat)

        # Row granularity: (8,128) for f32 blocks, (16,128) if any bf16 input.
        packing = 16 if (p2.dtype == jnp.bfloat16 or
                         t2.dtype == jnp.bfloat16) else _SUBLANE
        tile_r = min(_round_up(_MAX_TILE_ROWS, packing), _round_up(rows, packing))

        n_tiles = _cdiv(rows, tile_r)
        n_cores = _num_tensorcores()
        n_chunks = n_cores if (n_cores >= 2 and n_tiles >= n_cores) else 1
        steps = _cdiv(n_tiles, n_chunks)
        last_tile = n_tiles - 1

        def _in_map(c, j):
            # Clamp so a (rare) extra step of the last chunk never indexes past
            # the array; its contribution is masked to zero in-kernel anyway.
            return (jnp.minimum(c * steps + j, last_tile), 0)

        kernel = functools.partial(_bce_sum_kernel, tile_r=tile_r, steps=steps,
                                   n_valid=n_aligned)

        in_bytes = n_aligned * (p2.dtype.itemsize + t2.dtype.itemsize)
        cost = pl.CostEstimate(
            flops=7 * n_aligned,
            transcendentals=2 * n_aligned,
            bytes_accessed=in_bytes + n_chunks * _SUBLANE * _LANE * 4)

        first_sem = pltpu.CORE_PARALLEL if n_chunks > 1 else pltpu.ARBITRARY

        psums = pl.pallas_call(
            kernel,
            out_shape=jax.ShapeDtypeStruct((n_chunks, _SUBLANE, _LANE),
                                           jnp.float32),
            grid=(n_chunks, steps),
            in_specs=[
                pl.BlockSpec((tile_r, _LANE), _in_map),    # prediction (logits)
                pl.BlockSpec((tile_r, _LANE), _in_map),    # target
            ],
            out_specs=pl.BlockSpec((None, _SUBLANE, _LANE),
                                   lambda c, j: (c, 0, 0)),
            compiler_params=pltpu.CompilerParams(
                dimension_semantics=(first_sem, pltpu.ARBITRARY),
                vmem_limit_bytes=32 * 1024 * 1024),
            cost_estimate=cost,
        )(p2, t2)
        total = jnp.sum(psums)

    if n_aligned < n:
        # <128-element ragged tail: trivial XLA epilogue, no pad copy of the
        # full tensors.
        p_tail = p_flat[n_aligned:].astype(jnp.float32)
        t_tail = t_flat[n_aligned:].astype(jnp.float32)
        total = total + jnp.sum(_bce_terms(p_tail, t_tail))

    bce = total / jnp.float32(n)
    q = jnp.asarray(qloss, jnp.float32)
    loss = bce + jnp.float32(codebook_weight) * q      # broadcasts like PyTorch

    log = {
        "{}/total_loss".format(split): jnp.mean(loss),
        "{}/bce_loss".format(split): bce,
        "{}/quant_loss".format(split): jnp.mean(q),
    }
    return loss, log


def _reference(qloss, target, prediction, codebook_weight=1.0):
    x = prediction.astype(jnp.float32)
    z = target.astype(jnp.float32)
    per = jnp.maximum(x, 0.0) - x * z + jnp.log1p(jnp.exp(-jnp.abs(x)))
    bce = jnp.mean(per)
    return bce + codebook_weight * jnp.asarray(qloss, jnp.float32), bce


if __name__ == "__main__":
    key = jax.random.PRNGKey(0)
    k1, k2, k3 = jax.random.split(key, 3)

    # --- main case: NCHW, lane-aligned (2048 elements -> no slice, no mask) ---
    B, C, H, W = 2, 4, 16, 16
    prediction = jax.random.normal(k1, (B, C, H, W), jnp.float32)   # logits
    target = jax.random.uniform(k2, (B, C, H, W), jnp.float32)      # probs
    qloss = jax.random.uniform(k3, (), jnp.float32)                 # scalar

    loss, log = bce_loss_with_quant(qloss, target, prediction,
                                    split="train", codebook_weight=1.0)
    loss = jax.block_until_ready(loss)
    ref_loss, ref_bce = _reference(qloss, target, prediction, 1.0)
    assert jnp.allclose(loss, ref_loss, rtol=1e-5, atol=1e-5)
    assert jnp.allclose(log["train/bce_loss"], ref_bce, rtol=1e-5, atol=1e-5)
    assert jnp.allclose(log["train/quant_loss"], qloss, rtol=1e-6, atol=1e-6)

    # --- ragged case: aligned-prefix kernel + tail handled in the epilogue ---
    k4, k5 = jax.random.split(k3)
    p_rag = jax.random.normal(k4, (1, 3, 9, 25), jnp.float32)       # 675 elems
    t_rag = jax.random.uniform(k5, (1, 3, 9, 25), jnp.float32)
    loss2, log2 = bce_loss_with_quant(qloss, t_rag, p_rag, split="val",
                                      codebook_weight=0.5)
    loss2 = jax.block_until_ready(loss2)
    ref_loss2, ref_bce2 = _reference(qloss, t_rag, p_rag, 0.5)
    assert jnp.allclose(loss2, ref_loss2, rtol=1e-5, atol=1e-5)
    assert jnp.allclose(log2["val/bce_loss"], ref_bce2, rtol=1e-5, atol=1e-5)

    # --- bf16 pass-through case: exercises (16,128) packing, f32 math ---
    p_bf = prediction.astype(jnp.bfloat16)
    t_bf = target.astype(jnp.bfloat16)
    loss3, log3 = bce_loss_with_quant(qloss, t_bf, p_bf, split="bf",
                                      codebook_weight=1.0)
    loss3 = jax.block_until_ready(loss3)
    ref_loss3, ref_bce3 = _reference(qloss, t_bf, p_bf, 1.0)
    assert jnp.allclose(loss3, ref_loss3, rtol=1e-4, atol=1e-4)

    # --- multi-tile case: exercises accumulation across steps + partial tile ---
    k6, k7 = jax.random.split(k5)
    p_big = jax.random.normal(k6, (2, 4, 256, 288), jnp.float32)    # 589824 elems
    t_big = jax.random.uniform(k7, (2, 4, 256, 288), jnp.float32)
    loss4, log4 = bce_loss_with_quant(qloss, t_big, p_big, split="big",
                                      codebook_weight=1.0)
    loss4 = jax.block_until_ready(loss4)
    ref_loss4, ref_bce4 = _reference(qloss, t_big, p_big, 1.0)
    assert jnp.allclose(loss4, ref_loss4, rtol=1e-4, atol=1e-4)
    assert jnp.allclose(log4["big/bce_loss"], ref_bce4, rtol=1e-4, atol=1e-4)

    print("KERNEL_OK")
</pallas_src>

<mosaic_0001>
module attributes {stable_mosaic.version = 11 : i64} {
  func.func @_bce_sum_kernel(%arg0: i32, %arg1: i32, %arg2: memref<16x128xf32, #tpu.memory_space<vmem>>, %arg3: memref<16x128xf32, #tpu.memory_space<vmem>>, %arg4: memref<1x8x128xf32, #tpu.memory_space<vmem>>) attributes {dimension_semantics = [#tpu.dimension_semantics<arbitrary>, #tpu.dimension_semantics<arbitrary>], iteration_bounds = array<i64: 1, 1>, scalar_prefetch = 0 : i64, scratch_operands = 0 : i64, tpu.core_type = #tpu.core_type<tc>, window_params = [{transform_indices = @transform_0, window_bounds = array<i64: 16, 128>}, {transform_indices = @transform_1, window_bounds = array<i64: 16, 128>}, {transform_indices = @transform_2, window_bounds = array<i64: 1, 8, 128>}]} {
    %c0_i32 = arith.constant 0 : i32
    %0 = arith.cmpi eq, %arg1, %c0_i32 : i32
    %1 = arith.extui %0 : i1 to i32
    %c0_i32_0 = arith.constant 0 : i32
    %2 = arith.cmpi ne, %1, %c0_i32_0 : i32
    scf.if %2 {
      %cst_9 = arith.constant 0.000000e+00 : f32
      %23 = vector.broadcast %cst_9 : f32 to vector<8x128xf32>
      %c0_10 = arith.constant 0 : index
      %c0_11 = arith.constant 0 : index
      %c0_12 = arith.constant 0 : index
      %24 = vector.load %arg4[%c0_10, %c0_11, %c0_12] : memref<1x8x128xf32, #tpu.memory_space<vmem>>, vector<1x8x128xf32>
      %25 = vector.shape_cast %24 : vector<1x8x128xf32> to vector<8x128xf32>
      %26 = vector.shape_cast %23 : vector<8x128xf32> to vector<1x8x128xf32>
      tpu.vector_store %arg4[%c0_10, %c0_11, %c0_12], %26 {strides = array<i32>} : memref<1x8x128xf32, #tpu.memory_space<vmem>>, vector<1x8x128xf32>,
    } else {
    }
    %c0 = arith.constant 0 : index
    %c0_1 = arith.constant 0 : index
    %3 = vector.load %arg2[%c0, %c0_1] : memref<16x128xf32, #tpu.memory_space<vmem>>, vector<16x128xf32>
    %c0_2 = arith.constant 0 : index
    %c0_3 = arith.constant 0 : index
    %4 = vector.load %arg3[%c0_2, %c0_3] : memref<16x128xf32, #tpu.memory_space<vmem>>, vector<16x128xf32>
    %cst = arith.constant 0.000000e+00 : f32
    %5 = vector.broadcast %cst : f32 to vector<16x128xf32>
    %6 = arith.maximumf %3, %5 : vector<16x128xf32>
    %7 = arith.mulf %3, %4 : vector<16x128xf32>
    %8 = arith.subf %6, %7 : vector<16x128xf32>
    %9 = math.absf %3 : vector<16x128xf32>
    %cst_4 = arith.constant 0.000000e+00 : f32
    %10 = vector.broadcast %cst_4 : f32 to vector<16x128xf32>
    %11 = arith.subf %10, %9 : vector<16x128xf32>
    %12 = math.exp %11 : vector<16x128xf32>
    %13 = math.log1p %12 : vector<16x128xf32>
    %14 = arith.addf %8, %13 : vector<16x128xf32>
    %c1_i32 = arith.constant 1 : i32
    %15 = arith.muli %arg0, %c1_i32 : i32
    %16 = arith.addi %15, %arg1 : i32
    %c1_i32_5 = arith.constant 1 : i32
    %17 = arith.cmpi slt, %16, %c1_i32_5 : i32
    %18 = arith.extui %17 : i1 to i32
    %c0_i32_6 = arith.constant 0 : i32
    %19 = arith.cmpi ne, %18, %c0_i32_6 : i32
    scf.if %19 {
      %c0_9 = arith.constant 0 : index
      %c0_10 = arith.constant 0 : index
      %c0_11 = arith.constant 0 : index
      %23 = vector.load %arg4[%c0_9, %c0_10, %c0_11] : memref<1x8x128xf32, #tpu.memory_space<vmem>>, vector<1x8x128xf32>
      %24 = vector.shape_cast %23 : vector<1x8x128xf32> to vector<8x128xf32>
      %25 = vector.shape_cast %14 : vector<16x128xf32> to vector<2x8x128xf32>
      %cst_12 = arith.constant dense<0.000000e+00> : vector<8x128xf32>
      %26 = vector.multi_reduction <add>, %25, %cst_12 [0] : vector<2x8x128xf32> to vector<8x128xf32>
      %27 = arith.addf %24, %26 : vector<8x128xf32>
      %c0_13 = arith.constant 0 : index
      %c0_14 = arith.constant 0 : index
      %c0_15 = arith.constant 0 : index
      %28 = vector.load %arg4[%c0_13, %c0_14, %c0_15] : memref<1x8x128xf32, #tpu.memory_space<vmem>>, vector<1x8x128xf32>
      %29 = vector.shape_cast %28 : vector<1x8x128xf32> to vector<8x128xf32>
      %30 = vector.shape_cast %27 : vector<8x128xf32> to vector<1x8x128xf32>
      tpu.vector_store %arg4[%c0_13, %c0_14, %c0_15], %30 {strides = array<i32>} : memref<1x8x128xf32, #tpu.memory_space<vmem>>, vector<1x8x128xf32>,
    } else {
    }
    %c1_i32_7 = arith.constant 1 : i32
    %20 = arith.cmpi sge, %16, %c1_i32_7 : i32
    %21 = arith.extui %20 : i1 to i32
    %c0_i32_8 = arith.constant 0 : i32
    %22 = arith.cmpi ne, %21, %c0_i32_8 : i32
    scf.if %22 {
      %c2048_i32 = arith.constant 2048 : i32
      %23 = arith.muli %16, %c2048_i32 : i32
      %24 = tpu.iota {dimensions = array<i32: 0>} : vector<16x128xi32>
      %25 = tpu.iota {dimensions = array<i32: 1>} : vector<16x128xi32>
      %c128_i32 = arith.constant 128 : i32
      %26 = vector.broadcast %c128_i32 : i32 to vector<16x128xi32>
      %27 = arith.muli %24, %26 : vector<16x128xi32>
      %28 = vector.broadcast %23 : i32 to vector<16x128xi32>
      %29 = arith.addi %28, %27 : vector<16x128xi32>
      %30 = arith.addi %29, %25 : vector<16x128xi32>
      %c2048_i32_9 = arith.constant 2048 : i32
      %31 = vector.broadcast %c2048_i32_9 : i32 to vector<16x128xi32>
      %32 = arith.cmpi slt, %30, %31 : vector<16x128xi32>
      %cst_10 = arith.constant 0.000000e+00 : f32
      %33 = vector.broadcast %cst_10 : f32 to vector<16x128xf32>
      %34 = arith.select %32, %14, %33 : vector<16x128xi1>, vector<16x128xf32>
      %c0_11 = arith.constant 0 : index
      %c0_12 = arith.constant 0 : index
      %c0_13 = arith.constant 0 : index
      %35 = vector.load %arg4[%c0_11, %c0_12, %c0_13] : memref<1x8x128xf32, #tpu.memory_space<vmem>>, vector<1x8x128xf32>
      %36 = vector.shape_cast %35 : vector<1x8x128xf32> to vector<8x128xf32>
      %37 = vector.shape_cast %34 : vector<16x128xf32> to vector<2x8x128xf32>
      %cst_14 = arith.constant dense<0.000000e+00> : vector<8x128xf32>
      %38 = vector.multi_reduction <add>, %37, %cst_14 [0] : vector<2x8x128xf32> to vector<8x128xf32>
      %39 = arith.addf %36, %38 : vector<8x128xf32>
      %c0_15 = arith.constant 0 : index
      %c0_16 = arith.constant 0 : index
      %c0_17 = arith.constant 0 : index
      %40 = vector.load %arg4[%c0_15, %c0_16, %c0_17] : memref<1x8x128xf32, #tpu.memory_space<vmem>>, vector<1x8x128xf32>
      %41 = vector.shape_cast %40 : vector<1x8x128xf32> to vector<8x128xf32>
      %42 = vector.shape_cast %39 : vector<8x128xf32> to vector<1x8x128xf32>
      tpu.vector_store %arg4[%c0_15, %c0_16, %c0_17], %42 {strides = array<i32>} : memref<1x8x128xf32, #tpu.memory_space<vmem>>, vector<1x8x128xf32>,
    } else {
    }
    return
  }
  func.func @transform_0(%arg0: i32, %arg1: i32) -> (i32, i32) {
    %c1_i32 = arith.constant 1 : i32
    %0 = arith.muli %arg0, %c1_i32 : i32
    %1 = arith.addi %0, %arg1 : i32
    %c0_i32 = arith.constant 0 : i32
    %2 = arith.minsi %1, %c0_i32 : i32
    %c0_i32_0 = arith.constant 0 : i32
    %c0_i32_1 = arith.constant 0 : i32
    return %2, %c0_i32_0 : i32, i32
  }
  func.func @transform_1(%arg0: i32, %arg1: i32) -> (i32, i32) {
    %c1_i32 = arith.constant 1 : i32
    %0 = arith.muli %arg0, %c1_i32 : i32
    %1 = arith.addi %0, %arg1 : i32
    %c0_i32 = arith.constant 0 : i32
    %2 = arith.minsi %1, %c0_i32 : i32
    %c0_i32_0 = arith.constant 0 : i32
    %c0_i32_1 = arith.constant 0 : i32
    return %2, %c0_i32_0 : i32, i32
  }
  func.func @transform_2(%arg0: i32, %arg1: i32) -> (i32, i32, i32) {
    %c0_i32 = arith.constant 0 : i32
    %c0_i32_0 = arith.constant 0 : i32
    %c0_i32_1 = arith.constant 0 : i32
    return %arg0, %c0_i32, %c0_i32_0 : i32, i32, i32
  }
}

</mosaic_0001>

<llo_original>
// kernel: tpu_custom_call.1
$region0: #{tpu_custom_call.1}
  #allocation0 [shape = 'u32[]', space=smem, size = 0x4, offset = 0x4, fixed_abs, tag = 'smem constant byte address 0x4 - core index']
  #allocation1 [shape = 'u32[144,128]{1,0:T(1,128)}', space=vmem, size = 0x12000, scoped, tag = 'internal scratch']
  %s0 = inlined_call_operand.hbm [shape: f32[16,128], index: 0, kind: input, shape index: {}]
  %s1 = inlined_call_operand.hbm [shape: f32[16,128], index: 1, kind: input, shape index: {}]
  %s2 = inlined_call_operand.hbm [shape: f32[1,8,128], index: 2, kind: output, shape index: {}]
  %s3 = sld [smem:[#allocation0]]
  $region38: #{tpu_custom_call.1} parent=0
    _
  %s5 = ssub.s32 1, %s3
  %s6 = scalar_select 0, %s5, %s3
  $region1: #{tpu_custom_call.1} parent=0
    #allocation2 [shape = 'u8[8192]{0}', space=vmem, size = 0x2000, scoped, tag = 'input window, operand 0, single buffered']
    #allocation3 [shape = 's32[1]{0}', space=sflag, size = 0x4, scoped, tag = 'scoped memory for tpu_custom_call.1']
    #allocation4 [shape = 's32[1]{0}', space=sflag, size = 0x4, scoped, tag = 'scoped memory for tpu_custom_call.1']
    #allocation5 [shape = 'u8[8192]{0}', space=vmem, size = 0x2000, scoped, tag = 'input window, operand 1, single buffered']
    #allocation6 [shape = 's32[1]{0}', space=sflag, size = 0x4, scoped, tag = 'scoped memory for tpu_custom_call.1']
    #allocation7 [shape = 'u8[4096]{0}', space=vmem, size = 0x1000, scoped, tag = 'output window, operand 0, single buffered']
    %7 = vsyncpa [#allocation3], 0
    %8 = vsyncpa [#allocation6], 0
    %9 = vsyncpa [#allocation4], 0
    // Predicated region
    $region2: #{tpu_custom_call.1} parent=1 // pred_check
      _
    $region3: #{tpu_custom_call.1} parent=1 // pred_check_branch
      %11 = sbr.rel (0) target = $region5
    $region4: #{tpu_custom_call.1} parent=1 // pred_region
      %s12 = sadd.s32 0, 0
      %p13 = scmp.lt.s32.totalorder %s12, 0
      %s14 = scalar_select %p13, %s12, 0
      %s15 = smul.u32 2, %s14
      %s17 = ssub.s32 256, 256
      %18 = vsyncadd [#allocation3], %s17
      %s19 = smul.addr %s15, 128
      %s20 = scalar_lea.hbm %s0, %s19
      %s21 = sshll.u32 [#allocation2], 4
      %s22 = int_to_ptr.vmem [resolvable:$true] %s21
      %27 = dma.hbm_to_vmem [thread:$0]  %s20, 256, %s22, [#allocation3], 128, 128, 8
    $region5: #{tpu_custom_call.1} parent=1 // pred_fallthru
      _
    // Predicated region
    $region6: #{tpu_custom_call.1} parent=1 // pred_check
      _
    $region7: #{tpu_custom_call.1} parent=1 // pred_check_branch
      %29 = sbr.rel (0) target = $region9
    $region8: #{tpu_custom_call.1} parent=1 // pred_region
      %s30 = sadd.s32 0, 0
      %p31 = scmp.lt.s32.totalorder %s30, 0
      %s32 = scalar_select %p31, %s30, 0
      %s33 = smul.u32 2, %s32
      %s35 = ssub.s32 256, 256
      %36 = vsyncadd [#allocation6], %s35
      %s37 = smul.addr %s33, 128
      %s38 = scalar_lea.hbm %s1, %s37
      %s39 = sshll.u32 [#allocation5], 4
      %s40 = int_to_ptr.vmem [resolvable:$true] %s39
      %45 = dma.hbm_to_vmem [thread:$0]  %s38, 256, %s40, [#allocation6], 128, 128, 8
    $region9: #{tpu_custom_call.1} parent=1 // pred_fallthru
      _
    // Predicated region
    $region10: #{tpu_custom_call.1} parent=1 // pred_check
      _
    $region11: #{tpu_custom_call.1} parent=1 // pred_check_branch
      %47 = sbr.rel (0) target = $region13
    $region12: #{tpu_custom_call.1} parent=1 // pred_region
      %48 = dma.done [#allocation3], 256
    $region13: #{tpu_custom_call.1} parent=1 // pred_fallthru
      _
    // Predicated region
    $region14: #{tpu_custom_call.1} parent=1 // pred_check
      _
    $region15: #{tpu_custom_call.1} parent=1 // pred_check_branch
      %50 = sbr.rel (0) target = $region17
    $region16: #{tpu_custom_call.1} parent=1 // pred_region
      %51 = dma.done [#allocation6], 256
    $region17: #{tpu_custom_call.1} parent=1 // pred_fallthru
      _
    %s52 = sadd.s32 0, 0
    %p53 = scmp.lt.s32.totalorder %s52, 0
    %s54 = scalar_select %p53, %s52, 0
    %s55 = smul.u32 2, %s54
    %s56 = sadd.s32 0, 0
    %p57 = scmp.lt.s32.totalorder %s56, 0
    %s58 = scalar_select %p57, %s56, 0
    %s59 = smul.u32 2, %s58
    %p60 = scmp.eq.s32.totalorder 0, 0
    // Predicated region
    $region18: #{tpu_custom_call.1} parent=1 // pred_check
      %p61 = pneg %p60
    $region19: #{tpu_custom_call.1} parent=1 // pred_check_branch
      %63 = sbr.rel (%p61) target = $region21
    $region20: #{tpu_custom_call.1} parent=1 // pred_region
      %64 = vst [vmem:[#allocation7] sm:$0xff] 0.0
    $region21: #{tpu_custom_call.1} parent=1 // pred_fallthru
      _
    %v65 = vld [vmem:[#allocation2] sm:$0xff]
    %v66 = vld [vmem:[#allocation2 + $0x8] sm:$0xff]
    %v67 = vld [vmem:[#allocation5] sm:$0xff]
    %v68 = vld [vmem:[#allocation5 + $0x8] sm:$0xff]
    %v69 = vmax.f32 %v65, 0.0
    %v70 = vmax.f32 %v66, 0.0
    %v71 = vmul.f32 %v65, %v67
    %v72 = vmul.f32 %v66, %v68
    %v73 = vsub.f32 %v69, %v71
    %v74 = vsub.f32 %v70, %v72
    %v75 = vand.u32 2147483647, %v65
    %v76 = vand.u32 2147483647, %v66
    %v77 = vsub.f32 0.0, %v75
    %v78 = vsub.f32 0.0, %v76
    %v79 = vmul.f32 %v77, 1.442695
    %v80 = vpow.pop %v79
    %v81 = vmul.f32 %v78, 1.442695
    %v82 = vpow.pop %v81
    %v83 = vadd.f32 %v80, 1.0
    %v84 = vlog2.pop %v83
    %v85 = vmul.f32 %v84, 0.6931472
    %v86 = vmul.f32 -0.5, %v80
    %v87 = vadd.f32 %v86, 1.0
    %v88 = vmul.f32 %v87, %v80
    %v89 = vand.u32 2147483647, %v80
    %vm90 = vcmp.lt.f32.partialorder %v89, 0.0004427343
    %v91 = vsel %vm90, %v88, %v85
    %v92 = vadd.f32 %v82, 1.0
    %v93 = vlog2.pop %v92
    %v94 = vmul.f32 %v93, 0.6931472
    %v95 = vmul.f32 -0.5, %v82
    %v96 = vadd.f32 %v95, 1.0
    %v97 = vmul.f32 %v96, %v82
    %v98 = vand.u32 2147483647, %v82
    %vm99 = vcmp.lt.f32.partialorder %v98, 0.0004427343
    %v100 = vsel %vm99, %v97, %v94
    %v101 = vadd.f32 %v73, %v91
    %v102 = vadd.f32 %v74, %v100
    %s103 = sadd.s32 0, 0
    %p104 = scmp.lt.s32.totalorder %s103, 1
    // Predicated region
    $region22: #{tpu_custom_call.1} parent=1 // pred_check
      %p105 = pneg %p104
    $region23: #{tpu_custom_call.1} parent=1 // pred_check_branch
      %107 = sbr.rel (%p105) target = $region25
    $region24: #{tpu_custom_call.1} parent=1 // pred_region
      %v108 = vld [vmem:[#allocation7] sm:$0xff]
      %v109 = vadd.f32 %v101, %v102
      %v110 = vadd.f32 %v108, %v109
      %111 = vst [vmem:[#allocation7] sm:$0xff] %v110
    $region25: #{tpu_custom_call.1} parent=1 // pred_fallthru
      _
    %p112 = scmp.ge.s32.totalorder %s103, 1
    // Predicated region
    $region26: #{tpu_custom_call.1} parent=1 // pred_check
      %p113 = pneg %p112
    $region27: #{tpu_custom_call.1} parent=1 // pred_check_branch
      %115 = sbr.rel (%p113) target = $region29
    $region28: #{tpu_custom_call.1} parent=1 // pred_region
      %s116 = smul.u32 %s103, 2048
      %v117 = vlaneseq
      %v118 = vshrl.u32 %v117, 7
      %v119 = vadd.s32 %v118, 8
      %v120 = vlaneseq
      %v121 = vand.u32 %v120, 127
      %v122 = vmul.u32 %v118, 128
      %v123 = vmul.u32 %v119, 128
      %v124 = vstv %s116
      %v125 = vadd.s32 %v124, %v122
      %v126 = vadd.s32 %v124, %v123
      %v127 = vadd.s32 %v125, %v121
      %v128 = vadd.s32 %v126, %v121
      %vm129 = vcmp.lt.s32.totalorder %v127, 2048
      %vm130 = vcmp.lt.s32.totalorder %v128, 2048
      %v131 = vsel %vm129, %v101, 0.0
      %v132 = vsel %vm130, %v102, 0.0
      %v133 = vld [vmem:[#allocation7] sm:$0xff]
      %v134 = vadd.f32 %v131, %v132
      %v135 = vadd.f32 %v133, %v134
      %136 = vst [vmem:[#allocation7] sm:$0xff] %v135
    $region29: #{tpu_custom_call.1} parent=1 // pred_fallthru
      _
    // Predicated region
    $region30: #{tpu_custom_call.1} parent=1 // pred_check
      _
    $region31: #{tpu_custom_call.1} parent=1 // pred_check_branch
      %138 = sbr.rel (0) target = $region33
    $region32: #{tpu_custom_call.1} parent=1 // pred_region
      %s140 = ssub.s32 128, 128
      %141 = vsyncadd [#allocation4], %s140
      %s143 = sshll.u32 [#allocation7], 4
      %s144 = int_to_ptr.vmem [resolvable:$true] %s143
      %146 = dma.vmem_to_hbm [thread:$0]  %s144, 128, %s2, [#allocation4]
    $region33: #{tpu_custom_call.1} parent=1 // pred_fallthru
      _
    // Predicated region
    $region34: #{tpu_custom_call.1} parent=1 // pred_check
      _
    $region35: #{tpu_custom_call.1} parent=1 // pred_check_branch
      %148 = sbr.rel (0) target = $region37
    $region36: #{tpu_custom_call.1} parent=1 // pred_region
      %149 = dma.done [#allocation4], 128
    $region37: #{tpu_custom_call.1} parent=1 // pred_fallthru
      _
    %150 = vsyncpa [#allocation3], 1
    %151 = vsyncpa [#allocation6], 1
    %152 = vsyncpa [#allocation4], 1

</llo_original>
